<compile_context>
chip_gen: v7x
topology: tpu7x:2x2x1
jax: 0.10.0
libtpu: 0.0.40
codegen_flags: <defaults>
</compile_context>

<pallas_src>
import functools

import jax
import jax.numpy as jnp
from jax.experimental import pallas as pl
from jax.experimental.pallas import tpu as pltpu

H1 = 64      # hidden width of layer1
H2 = 32      # hidden width of layer2
LANE = 128   # lane-dense padded width of the fused head output


def _round_up(x, m):
    return (x + m - 1) // m * m


def make_policy_forward(out_dim, *, tb_max=512):
    """Returns a jitted (obs, packed_params) -> (mean, std) function."""

    def policy_kernel(obs_ref, w1_ref, w2_ref, wh_ref, pack_ref, out_ref):
        x = obs_ref[...]                                    # [TB, D_in]
        b1 = pack_ref[0:1, :H1]                             # [1, 64]
        b2 = pack_ref[1:2, :H2]                             # [1, 32]
        bh = pack_ref[2:3, :]                               # [1, 128]
        scale = pack_ref[3:4, :]                            # [1, 128] (max_mean | max_std | 0)

        h1 = jax.nn.sigmoid(
            jnp.dot(x, w1_ref[...], preferred_element_type=jnp.float32) + b1)      # [TB, 64]
        h2 = jax.nn.sigmoid(
            jnp.dot(h1, w2_ref[...], preferred_element_type=jnp.float32) + b2)     # [TB, 32]
        heads = jax.nn.sigmoid(
            jnp.dot(h2, wh_ref[...], preferred_element_type=jnp.float32) + bh)     # [TB, 128]
        out_ref[...] = (scale * heads).astype(out_ref.dtype)

    def forward(obs, p):
        b, d_in = obs.shape
        # Batch tile: multiple of 8, capped at tb_max; pad batch to a multiple.
        tb = tb_max if b >= tb_max else _round_up(b, 8)
        b_pad = _round_up(b, tb)
        obs_p = jnp.pad(obs, ((0, b_pad - b), (0, 0))) if b_pad != b else obs

        grid_spec = pltpu.PrefetchScalarGridSpec(
            num_scalar_prefetch=0,
            grid=(b_pad // tb,),
            in_specs=[
                pl.BlockSpec((tb, d_in), lambda i: (i, 0)),      # obs (tiled over batch)
                pl.BlockSpec((d_in, H1), lambda i: (0, 0)),      # w1 (resident)
                pl.BlockSpec((H1, H2), lambda i: (0, 0)),        # w2 (resident)
                pl.BlockSpec((H2, LANE), lambda i: (0, 0)),      # fused head weights
                pl.BlockSpec((8, LANE), lambda i: (0, 0)),       # packed biases + scale
            ],
            out_specs=pl.BlockSpec((tb, LANE), lambda i: (i, 0)),
        )

        out = pl.pallas_call(
            policy_kernel,
            out_shape=jax.ShapeDtypeStruct((b_pad, LANE), jnp.float32),
            grid_spec=grid_spec,
            compiler_params=pltpu.CompilerParams(
                dimension_semantics=("parallel",)),
        )(obs_p, p["w1"], p["w2"], p["wh"], p["pack"])

        mean = out[:b, :out_dim]
        std = out[:b, out_dim:2 * out_dim]
        return mean, std

    return jax.jit(forward)


def init_params(key, input_size, output_size):
    """Deterministic init mimicking nn.Linear's U(-1/sqrt(fan_in), 1/sqrt(fan_in)).

    Weights are stored pre-transposed as [in, out]; biases as [1, out] rows.
    """
    def linear(key, fan_in, fan_out):
        kw, kb = jax.random.split(key)
        bound = 1.0 / jnp.sqrt(float(fan_in))
        w = jax.random.uniform(kw, (fan_in, fan_out), jnp.float32, -bound, bound)
        b = jax.random.uniform(kb, (1, fan_out), jnp.float32, -bound, bound)
        return w, b

    k1, k2, k3, k4 = jax.random.split(key, 4)
    w1, b1 = linear(k1, input_size, H1)
    w2, b2 = linear(k2, H1, H2)
    wm, bm = linear(k3, H2, output_size)
    ws, bs = linear(k4, H2, output_size)
    return {"w1": w1, "b1": b1, "w2": w2, "b2": b2,
            "wm": wm, "bm": bm, "ws": ws, "bs": bs}


def pack_params(params, out_dim, max_mean, max_std):
    """One-time packing: fuse the two heads and collapse biases+scale to one block."""
    assert 2 * out_dim <= LANE, "out_dim too large for single-lane-block head fusion"
    wh = jnp.zeros((H2, LANE), jnp.float32)
    wh = wh.at[:, :out_dim].set(params["wm"]).at[:, out_dim:2 * out_dim].set(params["ws"])

    pack = jnp.zeros((8, LANE), jnp.float32)
    pack = pack.at[0, :H1].set(params["b1"][0])
    pack = pack.at[1, :H2].set(params["b2"][0])
    pack = pack.at[2, :out_dim].set(params["bm"][0])
    pack = pack.at[2, out_dim:2 * out_dim].set(params["bs"][0])
    scale = (jnp.zeros((LANE,), jnp.float32)
             .at[:out_dim].set(max_mean)
             .at[out_dim:2 * out_dim].set(max_std))
    pack = pack.at[3, :].set(scale)

    return {"w1": params["w1"], "w2": params["w2"], "wh": wh, "pack": pack}


def reference_forward(obs, params, max_mean, max_std):
    h1 = jax.nn.sigmoid(obs @ params["w1"] + params["b1"])
    h2 = jax.nn.sigmoid(h1 @ params["w2"] + params["b2"])
    mean = max_mean * jax.nn.sigmoid(h2 @ params["wm"] + params["bm"])
    std = max_std * jax.nn.sigmoid(h2 @ params["ws"] + params["bs"])
    return mean, std


# TODO(synk): sample() / log_prob() / inference() are thin JAX-level utilities
# (randn, clamp, log-prob sum) and are intentionally not turned into kernels.


if __name__ == "__main__":
    input_size = 16     # observation space dim
    output_size = 4     # action space dim
    batch = 8
    max_mean = 2.0
    max_std = 10.0

    key = jax.random.PRNGKey(0)
    k_obs, k_params, k_big = jax.random.split(key, 3)
    obs = jax.random.normal(k_obs, (batch, input_size), jnp.float32)
    params = init_params(k_params, input_size, output_size)
    packed = pack_params(params, output_size, max_mean, max_std)

    forward = make_policy_forward(output_size)

    # Small-batch check (grid = 1 step).
    mean, std = forward(obs, packed)
    jax.block_until_ready((mean, std))
    ref_mean, ref_std = reference_forward(obs, params, max_mean, max_std)
    assert mean.shape == (batch, output_size) and std.shape == (batch, output_size)
    assert jnp.allclose(mean, ref_mean, atol=1e-5, rtol=1e-5)
    assert jnp.allclose(std, ref_std, atol=1e-5, rtol=1e-5)

    # Larger batch exercising the batch grid + padding path (grid = 3 steps).
    big_b = 1040
    obs_big = jax.random.normal(k_big, (big_b, input_size), jnp.float32)
    mean_b, std_b = forward(obs_big, packed)
    jax.block_until_ready((mean_b, std_b))
    ref_mean_b, ref_std_b = reference_forward(obs_big, params, max_mean, max_std)
    assert mean_b.shape == (big_b, output_size) and std_b.shape == (big_b, output_size)
    assert jnp.allclose(mean_b, ref_mean_b, atol=1e-5, rtol=1e-5)
    assert jnp.allclose(std_b, ref_std_b, atol=1e-5, rtol=1e-5)

    print("KERNEL_OK")
</pallas_src>

<mosaic_0001>
module attributes {stable_mosaic.version = 11 : i64} {
  func.func @policy_kernel(%arg0: i32, %arg1: memref<8x16xf32, #tpu.memory_space<vmem>>, %arg2: memref<16x64xf32, #tpu.memory_space<vmem>>, %arg3: memref<64x32xf32, #tpu.memory_space<vmem>>, %arg4: memref<32x128xf32, #tpu.memory_space<vmem>>, %arg5: memref<8x128xf32, #tpu.memory_space<vmem>>, %arg6: memref<8x128xf32, #tpu.memory_space<vmem>>) attributes {dimension_semantics = [#tpu.dimension_semantics<parallel>], iteration_bounds = array<i64: 1>, scalar_prefetch = 0 : i64, scratch_operands = 0 : i64, tpu.core_type = #tpu.core_type<tc>, window_params = [{transform_indices = @transform_0, window_bounds = array<i64: 8, 16>}, {pipeline_mode = #tpu.pipeline_mode<synchronous>, transform_indices = @transform_1, window_bounds = array<i64: 16, 64>}, {pipeline_mode = #tpu.pipeline_mode<synchronous>, transform_indices = @transform_2, window_bounds = array<i64: 64, 32>}, {pipeline_mode = #tpu.pipeline_mode<synchronous>, transform_indices = @transform_3, window_bounds = array<i64: 32, 128>}, {pipeline_mode = #tpu.pipeline_mode<synchronous>, transform_indices = @transform_4, window_bounds = array<i64: 8, 128>}, {transform_indices = @transform_5, window_bounds = array<i64: 8, 128>}]} {
    %c0 = arith.constant 0 : index
    %c0_0 = arith.constant 0 : index
    %0 = vector.load %arg1[%c0, %c0_0] : memref<8x16xf32, #tpu.memory_space<vmem>>, vector<8x16xf32>
    %c0_1 = arith.constant 0 : index
    %c0_2 = arith.constant 0 : index
    %1 = vector.load %arg5[%c0_1, %c0_2] : memref<8x128xf32, #tpu.memory_space<vmem>>, vector<1x64xf32>
    %c1 = arith.constant 1 : index
    %c0_3 = arith.constant 0 : index
    %2 = vector.load %arg5[%c1, %c0_3] : memref<8x128xf32, #tpu.memory_space<vmem>>, vector<1x32xf32>
    %c2 = arith.constant 2 : index
    %c0_4 = arith.constant 0 : index
    %3 = vector.load %arg5[%c2, %c0_4] : memref<8x128xf32, #tpu.memory_space<vmem>>, vector<1x128xf32>
    %c3 = arith.constant 3 : index
    %c0_5 = arith.constant 0 : index
    %4 = vector.load %arg5[%c3, %c0_5] : memref<8x128xf32, #tpu.memory_space<vmem>>, vector<1x128xf32>
    %c0_6 = arith.constant 0 : index
    %c0_7 = arith.constant 0 : index
    %5 = vector.load %arg2[%c0_6, %c0_7] : memref<16x64xf32, #tpu.memory_space<vmem>>, vector<16x64xf32>
    %cst = arith.constant dense<0.000000e+00> : vector<8x64xf32>
    %6 = tpu.matmul %0, %5, %cst {dimension_numbers = #tpu.dot_dimension_numbers<[1], [0], [0], [1], [0, 0, 1, 1], [], []>} : vector<8x16xf32>, vector<16x64xf32>, vector<8x64xf32> -> vector<8x64xf32>
    %7 = vector.broadcast %1 : vector<1x64xf32> to vector<8x64xf32>
    %8 = arith.addf %6, %7 : vector<8x64xf32>
    %9 = arith.negf %8 : vector<8x64xf32>
    %10 = math.exp %9 : vector<8x64xf32>
    %cst_8 = arith.constant 1.000000e+00 : f32
    %11 = vector.broadcast %cst_8 : f32 to vector<8x64xf32>
    %12 = arith.addf %11, %10 : vector<8x64xf32>
    %13 = arith.divf %11, %12 : vector<8x64xf32>
    %c0_9 = arith.constant 0 : index
    %c0_10 = arith.constant 0 : index
    %14 = vector.load %arg3[%c0_9, %c0_10] : memref<64x32xf32, #tpu.memory_space<vmem>>, vector<64x32xf32>
    %cst_11 = arith.constant dense<0.000000e+00> : vector<8x32xf32>
    %15 = tpu.matmul %13, %14, %cst_11 {dimension_numbers = #tpu.dot_dimension_numbers<[1], [0], [0], [1], [0, 0, 1, 1], [], []>} : vector<8x64xf32>, vector<64x32xf32>, vector<8x32xf32> -> vector<8x32xf32>
    %16 = vector.broadcast %2 : vector<1x32xf32> to vector<8x32xf32>
    %17 = arith.addf %15, %16 : vector<8x32xf32>
    %18 = arith.negf %17 : vector<8x32xf32>
    %19 = math.exp %18 : vector<8x32xf32>
    %cst_12 = arith.constant 1.000000e+00 : f32
    %20 = vector.broadcast %cst_12 : f32 to vector<8x32xf32>
    %21 = arith.addf %20, %19 : vector<8x32xf32>
    %22 = arith.divf %20, %21 : vector<8x32xf32>
    %c0_13 = arith.constant 0 : index
    %c0_14 = arith.constant 0 : index
    %23 = vector.load %arg4[%c0_13, %c0_14] : memref<32x128xf32, #tpu.memory_space<vmem>>, vector<32x128xf32>
    %cst_15 = arith.constant dense<0.000000e+00> : vector<8x128xf32>
    %24 = tpu.matmul %22, %23, %cst_15 {dimension_numbers = #tpu.dot_dimension_numbers<[1], [0], [0], [1], [0, 0, 1, 1], [], []>} : vector<8x32xf32>, vector<32x128xf32>, vector<8x128xf32> -> vector<8x128xf32>
    %25 = vector.broadcast %3 : vector<1x128xf32> to vector<8x128xf32>
    %26 = arith.addf %24, %25 : vector<8x128xf32>
    %27 = arith.negf %26 : vector<8x128xf32>
    %28 = math.exp %27 : vector<8x128xf32>
    %cst_16 = arith.constant 1.000000e+00 : f32
    %29 = vector.broadcast %cst_16 : f32 to vector<8x128xf32>
    %30 = arith.addf %29, %28 : vector<8x128xf32>
    %31 = arith.divf %29, %30 : vector<8x128xf32>
    %32 = vector.broadcast %4 : vector<1x128xf32> to vector<8x128xf32>
    %33 = arith.mulf %32, %31 : vector<8x128xf32>
    %c0_17 = arith.constant 0 : index
    %c0_18 = arith.constant 0 : index
    %34 = vector.load %arg6[%c0_17, %c0_18] : memref<8x128xf32, #tpu.memory_space<vmem>>, vector<8x128xf32>
    tpu.vector_store %arg6[%c0_17, %c0_18], %33 {strides = array<i32>} : memref<8x128xf32, #tpu.memory_space<vmem>>, vector<8x128xf32>,
    return
  }
  func.func @transform_0(%arg0: i32) -> (i32, i32) {
    %c0_i32 = arith.constant 0 : i32
    %c0_i32_0 = arith.constant 0 : i32
    return %arg0, %c0_i32 : i32, i32
  }
  func.func @transform_1(%arg0: i32) -> (i32, i32) {
    %c0_i32 = arith.constant 0 : i32
    %c0_i32_0 = arith.constant 0 : i32
    %c0_i32_1 = arith.constant 0 : i32
    return %c0_i32, %c0_i32_0 : i32, i32
  }
  func.func @transform_2(%arg0: i32) -> (i32, i32) {
    %c0_i32 = arith.constant 0 : i32
    %c0_i32_0 = arith.constant 0 : i32
    %c0_i32_1 = arith.constant 0 : i32
    return %c0_i32, %c0_i32_0 : i32, i32
  }
  func.func @transform_3(%arg0: i32) -> (i32, i32) {
    %c0_i32 = arith.constant 0 : i32
    %c0_i32_0 = arith.constant 0 : i32
    %c0_i32_1 = arith.constant 0 : i32
    return %c0_i32, %c0_i32_0 : i32, i32
  }
  func.func @transform_4(%arg0: i32) -> (i32, i32) {
    %c0_i32 = arith.constant 0 : i32
    %c0_i32_0 = arith.constant 0 : i32
    %c0_i32_1 = arith.constant 0 : i32
    return %c0_i32, %c0_i32_0 : i32, i32
  }
  func.func @transform_5(%arg0: i32) -> (i32, i32) {
    %c0_i32 = arith.constant 0 : i32
    %c0_i32_0 = arith.constant 0 : i32
    return %arg0, %c0_i32 : i32, i32
  }
}

</mosaic_0001>

<llo_original>
// kernel: forward.1
$region0: #{forward.1}
  #allocation0 [shape = 'u32[]', space=smem, size = 0x4, offset = 0x4, fixed_abs, tag = 'smem constant byte address 0x4 - core index']
  #allocation1 [shape = 'u32[144,128]{1,0:T(1,128)}', space=vmem, size = 0x12000, scoped, tag = 'internal scratch']
  %s0 = inlined_call_operand.vmem [shape: f32[8,16], index: 0, kind: input, shape index: {}]
  %s1 = inlined_call_operand.vmem [shape: f32[16,64], index: 1, kind: input, shape index: {}]
  %s2 = inlined_call_operand.vmem [shape: f32[64,32], index: 2, kind: input, shape index: {}]
  %s3 = inlined_call_operand.vmem [shape: f32[32,128], index: 3, kind: input, shape index: {}]
  %s4 = inlined_call_operand.vmem [shape: f32[8,128], index: 4, kind: input, shape index: {}]
  %s5 = inlined_call_operand.vmem [shape: f32[8,128], index: 5, kind: output, shape index: {}]
  %s6 = sld [smem:[#allocation0]]
  $region30: #{forward.1} parent=0
    _
  %s8 = ssub.s32 1, %s6
  %s9 = scalar_select 0, %s8, %s6
  // Predicated region
  $region2: #{forward.1} parent=0 // pred_check
    _
  $region3: #{forward.1} parent=0 // pred_check_branch
    %11 = sbr.rel (0) target = $region5
  $region4: #{forward.1} parent=0 // pred_region
    _
  $region5: #{forward.1} parent=0 // pred_fallthru
    _
  // Predicated region
  $region6: #{forward.1} parent=0 // pred_check
    _
  $region7: #{forward.1} parent=0 // pred_check_branch
    %13 = sbr.rel (0) target = $region9
  $region8: #{forward.1} parent=0 // pred_region
    _
  $region9: #{forward.1} parent=0 // pred_fallthru
    _
  // Predicated region
  $region10: #{forward.1} parent=0 // pred_check
    _
  $region11: #{forward.1} parent=0 // pred_check_branch
    %15 = sbr.rel (0) target = $region13
  $region12: #{forward.1} parent=0 // pred_region
    _
  $region13: #{forward.1} parent=0 // pred_fallthru
    _
  // Predicated region
  $region14: #{forward.1} parent=0 // pred_check
    _
  $region15: #{forward.1} parent=0 // pred_check_branch
    %17 = sbr.rel (0) target = $region17
  $region16: #{forward.1} parent=0 // pred_region
    _
  $region17: #{forward.1} parent=0 // pred_fallthru
    _
  // Predicated region
  $region18: #{forward.1} parent=0 // pred_check
    _
  $region19: #{forward.1} parent=0 // pred_check_branch
    %19 = sbr.rel (0) target = $region21
  $region20: #{forward.1} parent=0 // pred_region
    _
  $region21: #{forward.1} parent=0 // pred_fallthru
    _
  %v20 = vld [vmem:[%s0] sm:$0xff]
  %v21 = vld [vmem:[%s4] sm:$0x1]
  %v22 = vld [vmem:[%s4 + $0x1] sm:$0x1]
  %v23 = vld [vmem:[%s4 + $0x2] sm:$0x1]
  %v24 = vld [vmem:[%s4 + $0x3] sm:$0x1]
  %v25 = vld [vmem:[%s1] sm:$0xff]
  %v26 = vld [vmem:[%s1 + $0x8] sm:$0xff]
  %v27 = vlaneseq
  %v28 = vshrl.u32 %v27, 7
  %v29 = vsub.s32 0, %v28
  %v30 = vrot.slane %v21, %v29
  %vm31 = vcmask 130048
  %v33 = vsel %vm31, %v20, 0
  %35 = vmatprep.subr.mxu0 0.0
  %36 = vmatpush1.msra.mxu0 %v25
  %37 = vmatprep.subr.mxu0 0.0
  %38 = vmatpush1.msra.mxu0 %v26
  %39 = vmatprep.subr.mxu0 0.0
  %40 = vmatpush1.msra.mxu0 0.0
  %41 = vmatprep.subr.mxu0 0.0
  %42 = vmatpush1.msra.mxu0 0.0
  %43 = vmatprep.subr.mxu0 0.0
  %44 = vmatpush1.msra.mxu0 0.0
  %45 = vmatprep.subr.mxu0 0.0
  %46 = vmatpush1.msra.mxu0 0.0
  %47 = vmatprep.subr.mxu0 0.0
  %48 = vmatpush1.msra.mxu0 0.0
  %49 = vmatprep.subr.mxu0 0.0
  %50 = vmatpush1.msra.mxu0 0.0
  %51 = vmatprep.subr.mxu0 0.0
  %52 = vmatpush1.msra.mxu0 0.0
  %53 = vmatprep.subr.mxu0 0.0
  %54 = vmatpush1.msra.mxu0 0.0
  %55 = vmatprep.subr.mxu0 0.0
  %56 = vmatpush1.msra.mxu0 0.0
  %57 = vmatprep.subr.mxu0 0.0
  %58 = vmatpush1.msra.mxu0 0.0
  %59 = vmatprep.subr.mxu0 0.0
  %60 = vmatpush1.msra.mxu0 0.0
  %61 = vmatprep.subr.mxu0 0.0
  %62 = vmatpush1.msra.mxu0 0.0
  %63 = vmatprep.subr.mxu0 0.0
  %64 = vmatpush1.msra.mxu0 0.0
  %65 = vmatprep.subr.mxu0 0.0
  %66 = vmatpush1.msra.mxu0 0.0
  %67 = vmatprep.subr.mxu0 0.0
  %68 = vmatpush1.msra.mxu0 0.0
  %69 = vmatprep.subr.mxu0 0.0
  %70 = vmatpush1.msra.mxu0 0.0
  %71 = vmatprep.subr.mxu0 0.0
  %72 = vmatpush1.msra.mxu0 0.0
  %73 = vmatprep.subr.mxu0 0.0
  %74 = vmatpush1.msra.mxu0 0.0
  %75 = vmatprep.subr.mxu0 0.0
  %76 = vmatpush1.msra.mxu0 0.0
  %77 = vmatprep.subr.mxu0 0.0
  %78 = vmatpush1.msra.mxu0 0.0
  %79 = vmatprep.subr.mxu0 0.0
  %80 = vmatpush1.msra.mxu0 0.0
  %81 = vmatprep.subr.mxu0 0.0
  %82 = vmatpush1.msra.mxu0 0.0
  %83 = vmatprep.subr.mxu0 0.0
  %84 = vmatpush1.msra.mxu0 0.0
  %85 = vmatprep.subr.mxu0 0.0
  %86 = vmatpush1.msra.mxu0 0.0
  %87 = vmatprep.subr.mxu0 0.0
  %88 = vmatpush1.msra.mxu0 0.0
  %89 = vmatprep.subr.mxu0 0.0
  %90 = vmatpush1.msra.mxu0 0.0
  %91 = vmatprep.subr.mxu0 0.0
  %92 = vmatpush1.msra.mxu0 0.0
  %93 = vmatprep.subr.mxu0 0.0
  %94 = vmatpush1.msra.mxu0 0.0
  %95 = vmatprep.subr.mxu0 0.0
  %96 = vmatpush1.msra.mxu0 0.0
  %97 = vmatprep.subr.mxu0 0.0
  %98 = vmatpush1.msra.mxu0 0.0
  %99 = vmatprep.mubr.f32.mxu0 0.0
  %100 = vmatmul.mubr.f32.gmra.mrb[0].mxu0 %v33
  %v101 = vpop.f32.mrb[0].mxu0
  %v102 = vadd.f32 %v30, %v101
  %v103 = vpop.f32.mrb[0].mxu0
  %104 = vdwg.mxu0
  %v105 = vxor.u32 %v102, 2147483648
  %v106 = vmul.f32 %v105, 1.442695
  %v107 = vpow.pop %v106
  %v108 = vadd.f32 %v107, 1.0
  %v109 = vrcp.pop %v108
  %v110 = vmul.f32 1.0, %v109
  %v111 = vld [vmem:[%s2] sm:$0xff]
  %v112 = vld [vmem:[%s2 + $0x8] sm:$0xff]
  %v113 = vld [vmem:[%s2 + $0x10] sm:$0xff]
  %v114 = vld [vmem:[%s2 + $0x18] sm:$0xff]
  %v115 = vld [vmem:[%s2 + $0x20] sm:$0xff]
  %v116 = vld [vmem:[%s2 + $0x28] sm:$0xff]
  %v117 = vld [vmem:[%s2 + $0x30] sm:$0xff]
  %v118 = vld [vmem:[%s2 + $0x38] sm:$0xff]
  %v119 = vlaneseq
  %v120 = vshrl.u32 %v119, 7
  %v121 = vsub.s32 0, %v120
  %v122 = vrot.slane %v22, %v121
  %vm123 = vcmask 523264
  %v125 = vsel %vm123, %v110, 0
  %127 = vmatprep.subr.mxu0 0.0
  %128 = vmatpush1.msra.mxu0 %v111
  %129 = vmatprep.subr.mxu0 0.0
  %130 = vmatpush1.msra.mxu0 %v112
  %131 = vmatprep.subr.mxu0 0.0
  %132 = vmatpush1.msra.mxu0 %v113
  %133 = vmatprep.subr.mxu0 0.0
  %134 = vmatpush1.msra.mxu0 %v114
  %135 = vmatprep.subr.mxu0 0.0
  %136 = vmatpush1.msra.mxu0 %v115
  %137 = vmatprep.subr.mxu0 0.0
  %138 = vmatpush1.msra.mxu0 %v116
  %139 = vmatprep.subr.mxu0 0.0
  %140 = vmatpush1.msra.mxu0 %v117
  %141 = vmatprep.subr.mxu0 0.0
  %142 = vmatpush1.msra.mxu0 %v118
  %143 = vmatprep.subr.mxu0 0.0
  %144 = vmatpush1.msra.mxu0 0.0
  %145 = vmatprep.subr.mxu0 0.0
  %146 = vmatpush1.msra.mxu0 0.0
  %147 = vmatprep.subr.mxu0 0.0
  %148 = vmatpush1.msra.mxu0 0.0
  %149 = vmatprep.subr.mxu0 0.0
  %150 = vmatpush1.msra.mxu0 0.0
  %151 = vmatprep.subr.mxu0 0.0
  %152 = vmatpush1.msra.mxu0 0.0
  %153 = vmatprep.subr.mxu0 0.0
  %154 = vmatpush1.msra.mxu0 0.0
  %155 = vmatprep.subr.mxu0 0.0
  %156 = vmatpush1.msra.mxu0 0.0
  %157 = vmatprep.subr.mxu0 0.0
  %158 = vmatpush1.msra.mxu0 0.0
  %159 = vmatprep.subr.mxu0 0.0
  %160 = vmatpush1.msra.mxu0 0.0
  %161 = vmatprep.subr.mxu0 0.0
  %162 = vmatpush1.msra.mxu0 0.0
  %163 = vmatprep.subr.mxu0 0.0
  %164 = vmatpush1.msra.mxu0 0.0
  %165 = vmatprep.subr.mxu0 0.0
  %166 = vmatpush1.msra.mxu0 0.0
  %167 = vmatprep.subr.mxu0 0.0
  %168 = vmatpush1.msra.mxu0 0.0
  %169 = vmatprep.subr.mxu0 0.0
  %170 = vmatpush1.msra.mxu0 0.0
  %171 = vmatprep.subr.mxu0 0.0
  %172 = vmatpush1.msra.mxu0 0.0
  %173 = vmatprep.subr.mxu0 0.0
  %174 = vmatpush1.msra.mxu0 0.0
  %175 = vmatprep.subr.mxu0 0.0
  %176 = vmatpush1.msra.mxu0 0.0
  %177 = vmatprep.subr.mxu0 0.0
  %178 = vmatpush1.msra.mxu0 0.0
  %179 = vmatprep.subr.mxu0 0.0
  %180 = vmatpush1.msra.mxu0 0.0
  %181 = vmatprep.subr.mxu0 0.0
  %182 = vmatpush1.msra.mxu0 0.0
  %183 = vmatprep.subr.mxu0 0.0
  %184 = vmatpush1.msra.mxu0 0.0
  %185 = vmatprep.subr.mxu0 0.0
  %186 = vmatpush1.msra.mxu0 0.0
  %187 = vmatprep.subr.mxu0 0.0
  %188 = vmatpush1.msra.mxu0 0.0
  %189 = vmatprep.subr.mxu0 0.0
  %190 = vmatpush1.msra.mxu0 0.0
  %191 = vmatprep.mubr.f32.mxu0 0.0
  %192 = vmatmul.mubr.f32.gmra.mrb[0].mxu0 %v125
  %v193 = vpop.f32.mrb[0].mxu0
  %v194 = vadd.f32 %v122, %v193
  %v195 = vpop.f32.mrb[0].mxu0
  %196 = vdwg.mxu0
  %v197 = vxor.u32 %v194, 2147483648
  %v198 = vmul.f32 %v197, 1.442695
  %v199 = vpow.pop %v198
  %v200 = vadd.f32 %v199, 1.0
  %v201 = vrcp.pop %v200
  %v202 = vmul.f32 1.0, %v201
  %v203 = vld [vmem:[%s3] sm:$0xff]
  %v204 = vld [vmem:[%s3 + $0x8] sm:$0xff]
  %v205 = vld [vmem:[%s3 + $0x10] sm:$0xff]
  %v206 = vld [vmem:[%s3 + $0x18] sm:$0xff]
  %v207 = vlaneseq
  %v208 = vshrl.u32 %v207, 7
  %v209 = vsub.s32 0, %v208
  %v210 = vrot.slane %v23, %v209
  %vm211 = vcmask 261120
  %v213 = vsel %vm211, %v202, 0
  %215 = vmatprep.subr.mxu0 0.0
  %216 = vmatpush1.msra.mxu0 %v203
  %217 = vmatprep.subr.mxu0 0.0
  %218 = vmatpush1.msra.mxu0 %v204
  %219 = vmatprep.subr.mxu0 0.0
  %220 = vmatpush1.msra.mxu0 %v205
  %221 = vmatprep.subr.mxu0 0.0
  %222 = vmatpush1.msra.mxu0 %v206
  %223 = vmatprep.subr.mxu0 0.0
  %224 = vmatpush1.msra.mxu0 0.0
  %225 = vmatprep.subr.mxu0 0.0
  %226 = vmatpush1.msra.mxu0 0.0
  %227 = vmatprep.subr.mxu0 0.0
  %228 = vmatpush1.msra.mxu0 0.0
  %229 = vmatprep.subr.mxu0 0.0
  %230 = vmatpush1.msra.mxu0 0.0
  %231 = vmatprep.subr.mxu0 0.0
  %232 = vmatpush1.msra.mxu0 0.0
  %233 = vmatprep.subr.mxu0 0.0
  %234 = vmatpush1.msra.mxu0 0.0
  %235 = vmatprep.subr.mxu0 0.0
  %236 = vmatpush1.msra.mxu0 0.0
  %237 = vmatprep.subr.mxu0 0.0
  %238 = vmatpush1.msra.mxu0 0.0
  %239 = vmatprep.subr.mxu0 0.0
  %240 = vmatpush1.msra.mxu0 0.0
  %241 = vmatprep.subr.mxu0 0.0
  %242 = vmatpush1.msra.mxu0 0.0
  %243 = vmatprep.subr.mxu0 0.0
  %244 = vmatpush1.msra.mxu0 0.0
  %245 = vmatprep.subr.mxu0 0.0
  %246 = vmatpush1.msra.mxu0 0.0
  %247 = vmatprep.subr.mxu0 0.0
  %248 = vmatpush1.msra.mxu0 0.0
  %249 = vmatprep.subr.mxu0 0.0
  %250 = vmatpush1.msra.mxu0 0.0
  %251 = vmatprep.subr.mxu0 0.0
  %252 = vmatpush1.msra.mxu0 0.0
  %253 = vmatprep.subr.mxu0 0.0
  %254 = vmatpush1.msra.mxu0 0.0
  %255 = vmatprep.subr.mxu0 0.0
  %256 = vmatpush1.msra.mxu0 0.0
  %257 = vmatprep.subr.mxu0 0.0
  %258 = vmatpush1.msra.mxu0 0.0
  %259 = vmatprep.subr.mxu0 0.0
  %260 = vmatpush1.msra.mxu0 0.0
  %261 = vmatprep.subr.mxu0 0.0
  %262 = vmatpush1.msra.mxu0 0.0
  %263 = vmatprep.subr.mxu0 0.0
  %264 = vmatpush1.msra.mxu0 0.0
  %265 = vmatprep.subr.mxu0 0.0
  %266 = vmatpush1.msra.mxu0 0.0
  %267 = vmatprep.subr.mxu0 0.0
  %268 = vmatpush1.msra.mxu0 0.0
  %269 = vmatprep.subr.mxu0 0.0
  %270 = vmatpush1.msra.mxu0 0.0
  %271 = vmatprep.subr.mxu0 0.0
  %272 = vmatpush1.msra.mxu0 0.0
  %273 = vmatprep.subr.mxu0 0.0
  %274 = vmatpush1.msra.mxu0 0.0
  %275 = vmatprep.subr.mxu0 0.0
  %276 = vmatpush1.msra.mxu0 0.0
  %277 = vmatprep.subr.mxu0 0.0
  %278 = vmatpush1.msra.mxu0 0.0
  %279 = vmatprep.mubr.f32.mxu0 0.0
  %280 = vmatmul.mubr.f32.gmra.mrb[0].mxu0 %v213
  %v281 = vpop.f32.mrb[0].mxu0
  %v282 = vadd.f32 %v210, %v281
  %v283 = vpop.f32.mrb[0].mxu0
  %284 = vdwg.mxu0
  %v285 = vxor.u32 %v282, 2147483648
  %v286 = vmul.f32 %v285, 1.442695
  %v287 = vpow.pop %v286
  %v288 = vadd.f32 %v287, 1.0
  %v289 = vrcp.pop %v288
  %v290 = vmul.f32 1.0, %v289
  %v291 = vlaneseq
  %v292 = vshrl.u32 %v291, 7
  %v293 = vsub.s32 0, %v292
  %v294 = vrot.slane %v24, %v293
  %v295 = vmul.f32 %v294, %v290
  %296 = vst [vmem:[%s5] sm:$0xff] %v295
  // Predicated region
  $region22: #{forward.1} parent=0 // pred_check
    _
  $region23: #{forward.1} parent=0 // pred_check_branch
    %298 = sbr.rel (0) target = $region25
  $region24: #{forward.1} parent=0 // pred_region
    _
  $region25: #{forward.1} parent=0 // pred_fallthru
    _
  // Predicated region
  $region26: #{forward.1} parent=0 // pred_check
    _
  $region27: #{forward.1} parent=0 // pred_check_branch
    %300 = sbr.rel (0) target = $region29
  $region28: #{forward.1} parent=0 // pred_region
    _
  $region29: #{forward.1} parent=0 // pred_fallthru
    _

</llo_original>
